<compile_context>
chip_gen: v5e
topology: v5e:2x2
jax: 0.10.0
libtpu: 0.0.40
codegen_flags: <defaults>
</compile_context>

<pallas_src>
import functools
import math

import jax
import jax.numpy as jnp
from jax.experimental import pallas as pl
from jax.experimental.pallas import tpu as pltpu

_LANES = 128
_SUBLANES = 8
_TARGET_TILE_ROWS = 2048            # rows per grid step (2048*128 f32 = 1 MiB/stream)
_SMALL_N = _SUBLANES * _LANES       # below one minimal tile -> plain jnp fast path


def _elementwise_kernel(x_ref, add_ref, sub_ref, mul_ref, div_ref, gt_ref, lt_ref):
    x = x_ref[...]
    add_ref[...] = x + 2.0
    sub_ref[...] = x - 2.0
    mul_ref[...] = x * 2.0
    div_ref[...] = x * 0.5                        # exact for fp: x/2 == x*0.5
    gt_ref[...] = (x > 2.0).astype(gt_ref.dtype)  # bool (or uint8 fallback)
    lt_ref[...] = (x < 2.0).astype(lt_ref.dtype)


@functools.cache
def _bool_outputs_supported() -> bool:
    """Probe once (AOT lower+compile only, no execution) whether Mosaic
    accepts bool-dtype kernel outputs."""
    def probe(x_ref, o_ref):
        o_ref[...] = x_ref[...] > 0.0
    try:
        call = pl.pallas_call(
            probe, out_shape=jax.ShapeDtypeStruct((_SUBLANES, _LANES), jnp.bool_))
        jax.jit(call).lower(
            jax.ShapeDtypeStruct((_SUBLANES, _LANES), jnp.float32)).compile()
        return True
    except Exception:
        return False


def _round_up(a: int, b: int) -> int:
    return -(-a // b) * b


def _pick_tile_rows(rows: int) -> int:
    """Choose the row-tile so large inputs get 2048-row steps, mid-size inputs
    get >=2 steps (v7x megacore), and tiny inputs use one full-array block."""
    if rows >= 2 * _TARGET_TILE_ROWS:
        return _TARGET_TILE_ROWS
    if rows >= 256:
        # Split in two; keep the tile a multiple of 32 rows so byte-wide mask
        # blocks stay on their native (32,128) packing.
        return min(_TARGET_TILE_ROWS, _round_up(-(-rows // 2), 32))
    return rows  # single block == full array (exempt from (8,128) block rule)


@functools.lru_cache(maxsize=None)
def _build_call(rows: int, tm: int, in_dtype: str, mask_dtype: str):
    in_dt = jnp.dtype(in_dtype)
    mask_dt = jnp.dtype(mask_dtype)
    n = rows * _LANES
    grid = pl.cdiv(rows, tm)   # partial last block handled by Pallas

    spec = pl.BlockSpec((tm, _LANES), lambda i: (i, 0))
    out_shapes = (
        jax.ShapeDtypeStruct((rows, _LANES), in_dt),    # add
        jax.ShapeDtypeStruct((rows, _LANES), in_dt),    # sub
        jax.ShapeDtypeStruct((rows, _LANES), in_dt),    # mul
        jax.ShapeDtypeStruct((rows, _LANES), in_dt),    # div
        jax.ShapeDtypeStruct((rows, _LANES), mask_dt),  # x > 2
        jax.ShapeDtypeStruct((rows, _LANES), mask_dt),  # x < 2
    )

    # 1 input + 4 fp outputs + 2 mask outputs; the x2 is the double-buffer.
    bytes_per_row = _LANES * (5 * in_dt.itemsize + 2 * mask_dt.itemsize)
    per_step = tm * bytes_per_row * 2
    vmem_limit = int(min(max(per_step + (4 << 20), 16 << 20), 48 << 20))
    bytes_accessed = rows * bytes_per_row

    return pl.pallas_call(
        _elementwise_kernel,
        out_shape=out_shapes,
        grid=(grid,),
        in_specs=[spec],
        out_specs=tuple(spec for _ in out_shapes),
        compiler_params=pltpu.CompilerParams(
            dimension_semantics=("parallel",),
            vmem_limit_bytes=vmem_limit,
        ),
        cost_estimate=pl.CostEstimate(
            flops=6 * n, transcendentals=0, bytes_accessed=bytes_accessed),
    )


def pt_module_forward(x):
    """Equivalent of PtModule.forward: (x+2, x-2, x*2, x/2, x>2, x<2)."""
    x = jnp.asarray(x)
    orig_shape = x.shape
    n = math.prod(orig_shape) if orig_shape else 1

    # Fast path: tiny inputs (pallas_call fixed overhead dominates) and
    # non-float dtypes (torch promotion: int add/sub/mul stay int, div -> float).
    if n < _SMALL_N or not jnp.issubdtype(x.dtype, jnp.floating):
        return (x + 2, x - 2, x * 2, x / 2, x > 2, x < 2)

    mask_dtype = jnp.bool_ if _bool_outputs_supported() else jnp.uint8

    # Lane-dense (rows, 128) layout; rows padded only to the 8-sublane minimum.
    rows = _round_up(-(-n // _LANES), _SUBLANES)
    padded_n = rows * _LANES

    x_flat = x.reshape(-1)
    if padded_n != n:
        x_flat = jnp.pad(x_flat, (0, padded_n - n))
    x2d = x_flat.reshape(rows, _LANES)

    tm = _pick_tile_rows(rows)
    call = _build_call(rows, tm,
                       jnp.dtype(x.dtype).name, jnp.dtype(mask_dtype).name)
    add_r, sub_r, mul_r, div_r, gt_r, lt_r = call(x2d)

    def back(a, want_dtype):
        a = a.reshape(-1)
        if padded_n != n:
            a = a[:n]
        if a.dtype != want_dtype:
            a = a.astype(want_dtype)   # only taken on the uint8 fallback path
        return a.reshape(orig_shape)

    return (back(add_r, x.dtype), back(sub_r, x.dtype),
            back(mul_r, x.dtype), back(div_r, x.dtype),
            back(gt_r, jnp.bool_), back(lt_r, jnp.bool_))


if __name__ == "__main__":
    key = jax.random.PRNGKey(0)
    x = jax.random.normal(key, (2, 4, 16, 16), dtype=jnp.float32) * 3.0

    outs = pt_module_forward(x)
    outs = jax.block_until_ready(outs)

    # Sanity check against plain JAX reference (torch-equivalent semantics).
    ref = (x + 2, x - 2, x * 2, x / 2, x > 2, x < 2)
    for got, want in zip(outs, ref):
        assert got.shape == want.shape, (got.shape, want.shape)
        assert got.dtype == want.dtype, (got.dtype, want.dtype)
        assert jnp.allclose(got.astype(jnp.float32),
                            want.astype(jnp.float32)), "mismatch"

    print("KERNEL_OK")
</pallas_src>

<mosaic_0001>
module attributes {stable_mosaic.version = 11 : i64} {
  func.func @_elementwise_kernel(%arg0: i32, %arg1: memref<16x128xf32, #tpu.memory_space<vmem>>, %arg2: memref<16x128xf32, #tpu.memory_space<vmem>>, %arg3: memref<16x128xf32, #tpu.memory_space<vmem>>, %arg4: memref<16x128xf32, #tpu.memory_space<vmem>>, %arg5: memref<16x128xf32, #tpu.memory_space<vmem>>, %arg6: memref<16x128xi8, #tpu.memory_space<vmem>>, %arg7: memref<16x128xi8, #tpu.memory_space<vmem>>) attributes {dimension_semantics = [#tpu.dimension_semantics<parallel>], iteration_bounds = array<i64: 1>, scalar_prefetch = 0 : i64, scratch_operands = 0 : i64, tpu.core_type = #tpu.core_type<tc>, window_params = [{transform_indices = @transform_0, window_bounds = array<i64: 16, 128>}, {transform_indices = @transform_1, window_bounds = array<i64: 16, 128>}, {transform_indices = @transform_2, window_bounds = array<i64: 16, 128>}, {transform_indices = @transform_3, window_bounds = array<i64: 16, 128>}, {transform_indices = @transform_4, window_bounds = array<i64: 16, 128>}, {transform_indices = @transform_5, window_bounds = array<i64: 16, 128>}, {transform_indices = @transform_6, window_bounds = array<i64: 16, 128>}]} {
    %c0 = arith.constant 0 : index
    %c0_0 = arith.constant 0 : index
    %0 = vector.load %arg1[%c0, %c0_0] : memref<16x128xf32, #tpu.memory_space<vmem>>, vector<16x128xf32>
    %cst = arith.constant 2.000000e+00 : f32
    %1 = vector.broadcast %cst : f32 to vector<16x128xf32>
    %2 = arith.addf %0, %1 : vector<16x128xf32>
    %c0_1 = arith.constant 0 : index
    %c0_2 = arith.constant 0 : index
    %3 = vector.load %arg2[%c0_1, %c0_2] : memref<16x128xf32, #tpu.memory_space<vmem>>, vector<16x128xf32>
    tpu.vector_store %arg2[%c0_1, %c0_2], %2 {strides = array<i32>} : memref<16x128xf32, #tpu.memory_space<vmem>>, vector<16x128xf32>,
    %cst_3 = arith.constant 2.000000e+00 : f32
    %4 = vector.broadcast %cst_3 : f32 to vector<16x128xf32>
    %5 = arith.subf %0, %4 : vector<16x128xf32>
    %c0_4 = arith.constant 0 : index
    %c0_5 = arith.constant 0 : index
    %6 = vector.load %arg3[%c0_4, %c0_5] : memref<16x128xf32, #tpu.memory_space<vmem>>, vector<16x128xf32>
    tpu.vector_store %arg3[%c0_4, %c0_5], %5 {strides = array<i32>} : memref<16x128xf32, #tpu.memory_space<vmem>>, vector<16x128xf32>,
    %cst_6 = arith.constant 2.000000e+00 : f32
    %7 = vector.broadcast %cst_6 : f32 to vector<16x128xf32>
    %8 = arith.mulf %0, %7 : vector<16x128xf32>
    %c0_7 = arith.constant 0 : index
    %c0_8 = arith.constant 0 : index
    %9 = vector.load %arg4[%c0_7, %c0_8] : memref<16x128xf32, #tpu.memory_space<vmem>>, vector<16x128xf32>
    tpu.vector_store %arg4[%c0_7, %c0_8], %8 {strides = array<i32>} : memref<16x128xf32, #tpu.memory_space<vmem>>, vector<16x128xf32>,
    %cst_9 = arith.constant 5.000000e-01 : f32
    %10 = vector.broadcast %cst_9 : f32 to vector<16x128xf32>
    %11 = arith.mulf %0, %10 : vector<16x128xf32>
    %c0_10 = arith.constant 0 : index
    %c0_11 = arith.constant 0 : index
    %12 = vector.load %arg5[%c0_10, %c0_11] : memref<16x128xf32, #tpu.memory_space<vmem>>, vector<16x128xf32>
    tpu.vector_store %arg5[%c0_10, %c0_11], %11 {strides = array<i32>} : memref<16x128xf32, #tpu.memory_space<vmem>>, vector<16x128xf32>,
    %cst_12 = arith.constant 2.000000e+00 : f32
    %13 = vector.broadcast %cst_12 : f32 to vector<16x128xf32>
    %14 = arith.cmpf ogt, %0, %13 : vector<16x128xf32>
    %15 = arith.extui %14 : vector<16x128xi1> to vector<16x128xi8>
    %c0_13 = arith.constant 0 : index
    %c0_14 = arith.constant 0 : index
    %16 = vector.load %arg6[%c0_13, %c0_14] : memref<16x128xi8, #tpu.memory_space<vmem>>, vector<16x128xi8>
    tpu.vector_store %arg6[%c0_13, %c0_14], %15 {strides = array<i32>} : memref<16x128xi8, #tpu.memory_space<vmem>>, vector<16x128xi8>,
    %cst_15 = arith.constant 2.000000e+00 : f32
    %17 = vector.broadcast %cst_15 : f32 to vector<16x128xf32>
    %18 = arith.cmpf olt, %0, %17 : vector<16x128xf32>
    %19 = arith.extui %18 : vector<16x128xi1> to vector<16x128xi8>
    %c0_16 = arith.constant 0 : index
    %c0_17 = arith.constant 0 : index
    %20 = vector.load %arg7[%c0_16, %c0_17] : memref<16x128xi8, #tpu.memory_space<vmem>>, vector<16x128xi8>
    tpu.vector_store %arg7[%c0_16, %c0_17], %19 {strides = array<i32>} : memref<16x128xi8, #tpu.memory_space<vmem>>, vector<16x128xi8>,
    return
  }
  func.func @transform_0(%arg0: i32) -> (i32, i32) {
    %c0_i32 = arith.constant 0 : i32
    %c0_i32_0 = arith.constant 0 : i32
    return %arg0, %c0_i32 : i32, i32
  }
  func.func @transform_1(%arg0: i32) -> (i32, i32) {
    %c0_i32 = arith.constant 0 : i32
    %c0_i32_0 = arith.constant 0 : i32
    return %arg0, %c0_i32 : i32, i32
  }
  func.func @transform_2(%arg0: i32) -> (i32, i32) {
    %c0_i32 = arith.constant 0 : i32
    %c0_i32_0 = arith.constant 0 : i32
    return %arg0, %c0_i32 : i32, i32
  }
  func.func @transform_3(%arg0: i32) -> (i32, i32) {
    %c0_i32 = arith.constant 0 : i32
    %c0_i32_0 = arith.constant 0 : i32
    return %arg0, %c0_i32 : i32, i32
  }
  func.func @transform_4(%arg0: i32) -> (i32, i32) {
    %c0_i32 = arith.constant 0 : i32
    %c0_i32_0 = arith.constant 0 : i32
    return %arg0, %c0_i32 : i32, i32
  }
  func.func @transform_5(%arg0: i32) -> (i32, i32) {
    %c0_i32 = arith.constant 0 : i32
    %c0_i32_0 = arith.constant 0 : i32
    return %arg0, %c0_i32 : i32, i32
  }
  func.func @transform_6(%arg0: i32) -> (i32, i32) {
    %c0_i32 = arith.constant 0 : i32
    %c0_i32_0 = arith.constant 0 : i32
    return %arg0, %c0_i32 : i32, i32
  }
}

</mosaic_0001>

<llo_original>
// kernel: tpu_custom_call.1
$region0: #{tpu_custom_call.1}
  #allocation0 [shape = 'u32[]', space=smem, size = 0x4, offset = 0x4, fixed_abs, tag = 'smem constant byte address 0x4 - core index']
  #allocation1 [shape = 'u32[72,128]{1,0:T(1,128)}', space=vmem, size = 0x9000, scoped, tag = 'internal scratch']
  %s0 = inlined_call_operand.hbm [shape: f32[16,128], index: 0, kind: input, shape index: {}]
  %s1 = inlined_call_operand.hbm [shape: f32[16,128], index: 1, kind: output, shape index: {0}]
  %s2 = inlined_call_operand.hbm [shape: f32[16,128], index: 2, kind: output, shape index: {1}]
  %s3 = inlined_call_operand.hbm [shape: f32[16,128], index: 3, kind: output, shape index: {2}]
  %s4 = inlined_call_operand.hbm [shape: f32[16,128], index: 4, kind: output, shape index: {3}]
  %s5 = inlined_call_operand.hbm [shape: u8[16,128], index: 5, kind: output, shape index: {4}]
  %s6 = inlined_call_operand.hbm [shape: u8[16,128], index: 6, kind: output, shape index: {5}]
  %7 = xla_tuple %s1, %s2, %s3, %s4, %s5, %s6
  %s8 = sld [smem:[#allocation0]]
  $region58: #{tpu_custom_call.1} parent=0
    _
  %s10 = ssub.s32 1, %s8
  %s11 = scalar_select 0, %s10, %s8
  $region1: #{tpu_custom_call.1} parent=0
    #allocation2 [shape = 'u8[8192]{0}', space=vmem, size = 0x2000, scoped, tag = 'input window, operand 0, single buffered']
    #allocation3 [shape = 's32[1]{0}', space=sflag, size = 0x4, scoped, tag = 'scoped memory for tpu_custom_call.1']
    #allocation4 [shape = 's32[1]{0}', space=sflag, size = 0x4, scoped, tag = 'scoped memory for tpu_custom_call.1']
    #allocation5 [shape = 'u8[8192]{0}', space=vmem, size = 0x2000, scoped, tag = 'output window, operand 0, single buffered']
    #allocation6 [shape = 'u8[8192]{0}', space=vmem, size = 0x2000, scoped, tag = 'output window, operand 1, single buffered']
    #allocation7 [shape = 's32[1]{0}', space=sflag, size = 0x4, scoped, tag = 'scoped memory for tpu_custom_call.1']
    #allocation8 [shape = 'u8[8192]{0}', space=vmem, size = 0x2000, scoped, tag = 'output window, operand 2, single buffered']
    #allocation9 [shape = 'u8[8192]{0}', space=vmem, size = 0x2000, scoped, tag = 'output window, operand 3, single buffered']
    #allocation10 [shape = 's32[1]{0}', space=sflag, size = 0x4, scoped, tag = 'scoped memory for tpu_custom_call.1']
    #allocation11 [shape = 'u8[2048]{0}', space=vmem, size = 0x800, scoped, tag = 'output window, operand 4, single buffered']
    #allocation12 [shape = 'u8[2048]{0}', space=vmem, size = 0x800, scoped, tag = 'output window, operand 5, single buffered']
    #allocation13 [shape = 's32[1]{0}', space=sflag, size = 0x4, scoped, tag = 'scoped memory for tpu_custom_call.1']
    %12 = vsyncpa [#allocation3], 0
    %13 = vsyncpa [#allocation4], 0
    %14 = vsyncpa [#allocation7], 0
    %15 = vsyncpa [#allocation10], 0
    %16 = vsyncpa [#allocation13], 0
    // Predicated region
    $region2: #{tpu_custom_call.1} parent=1 // pred_check
      _
    $region3: #{tpu_custom_call.1} parent=1 // pred_check_branch
      %18 = sbr.rel (0) target = $region5
    $region4: #{tpu_custom_call.1} parent=1 // pred_region
      %20 = vsyncadd [#allocation3], 0
      %s21 = sshll.u32 %s0, 4
      %s22 = int_to_ptr.hbm [resolvable:$true] %s21
      %s23 = sshll.u32 [#allocation2], 4
      %s24 = int_to_ptr.vmem [resolvable:$true] %s23
      %29 = dma.hbm_to_vmem [thread:$0]  %s22, 256, %s24, [#allocation3], 128, 128, 8
    $region5: #{tpu_custom_call.1} parent=1 // pred_fallthru
      _
    // Predicated region
    $region6: #{tpu_custom_call.1} parent=1 // pred_check
      _
    $region7: #{tpu_custom_call.1} parent=1 // pred_check_branch
      %31 = sbr.rel (0) target = $region9
    $region8: #{tpu_custom_call.1} parent=1 // pred_region
      %33 = dma.done [#allocation3], 256
    $region9: #{tpu_custom_call.1} parent=1 // pred_fallthru
      _
    %v36 = vld [vmem:[#allocation2] sm:$0xff]
    %v37 = vld [vmem:[#allocation2 + $0x8] sm:$0xff]
    %v38 = vadd.f32 %v36, 2.0
    %v39 = vadd.f32 %v37, 2.0
    %40 = vst [vmem:[#allocation5] sm:$0xff] %v38
    %41 = vst [vmem:[#allocation5 + $0x8] sm:$0xff] %v39
    %v42 = vsub.f32 %v36, 2.0
    %v43 = vsub.f32 %v37, 2.0
    %44 = vst [vmem:[#allocation6] sm:$0xff] %v42
    %45 = vst [vmem:[#allocation6 + $0x8] sm:$0xff] %v43
    %v46 = vmul.f32 %v36, 2.0
    %v47 = vmul.f32 %v37, 2.0
    %48 = vst [vmem:[#allocation8] sm:$0xff] %v46
    %49 = vst [vmem:[#allocation8 + $0x8] sm:$0xff] %v47
    %v50 = vmul.f32 %v36, 0.5
    %v51 = vmul.f32 %v37, 0.5
    %52 = vst [vmem:[#allocation9] sm:$0xff] %v50
    %53 = vst [vmem:[#allocation9 + $0x8] sm:$0xff] %v51
    %vm54 = vcmp.gt.f32.partialorder %v36, 2.0
    %vm55 = vcmp.gt.f32.partialorder %v37, 2.0
    %vm56 = vmpackc.low %vm55, %vm54
    %v57 = vsel %vm56, 16711935, 0
    %v58 = vsel %vm56, 16711935, 0
    %v59 = vpack.c.b8 %v58, %v57
    %vm60 = vnez %v59
    %v61 = vsel %vm60, 16843009, 0
    %v62 = vunpack.c.0.s8 %v61
    %v63 = vunpack.c.1.s8 %v61
    %v64 = vpack.c.b16 %v62, %v62
    %v65 = vpack.c.b8 %v64, %v64
    %v66 = vpack.c.b16 %v63, %v63
    %v67 = vpack.c.b8 %v66, %v66
    %68 = vst [vmem:[#allocation11] sm:$0x3] %v65
    %69 = vst [vmem:[#allocation11 + $0x2] sm:$0x3] %v67
    %vm70 = vcmp.lt.f32.partialorder %v36, 2.0
    %vm71 = vcmp.lt.f32.partialorder %v37, 2.0
    %vm72 = vmpackc.low %vm71, %vm70
    %v73 = vsel %vm72, 16711935, 0
    %v74 = vsel %vm72, 16711935, 0
    %v75 = vpack.c.b8 %v74, %v73
    %vm76 = vnez %v75
    %v77 = vsel %vm76, 16843009, 0
    %v78 = vunpack.c.0.s8 %v77
    %v79 = vunpack.c.1.s8 %v77
    %v80 = vpack.c.b16 %v78, %v78
    %v81 = vpack.c.b8 %v80, %v80
    %v82 = vpack.c.b16 %v79, %v79
    %v83 = vpack.c.b8 %v82, %v82
    %84 = vst [vmem:[#allocation12] sm:$0x3] %v81
    %85 = vst [vmem:[#allocation12 + $0x2] sm:$0x3] %v83
    // Predicated region
    $region10: #{tpu_custom_call.1} parent=1 // pred_check
      _
    $region11: #{tpu_custom_call.1} parent=1 // pred_check_branch
      %87 = sbr.rel (0) target = $region13
    $region12: #{tpu_custom_call.1} parent=1 // pred_region
      %89 = vsyncadd [#allocation4], 0
      %s90 = sshll.u32 [#allocation5], 4
      %s91 = int_to_ptr.vmem [resolvable:$true] %s90
      %s92 = sshll.u32 %s1, 4
      %s93 = int_to_ptr.hbm [resolvable:$true] %s92
      %98 = dma.vmem_to_hbm [thread:$0]  %s91, 256, %s93, [#allocation4], 128, 128, 8
    $region13: #{tpu_custom_call.1} parent=1 // pred_fallthru
      _
    // Predicated region
    $region14: #{tpu_custom_call.1} parent=1 // pred_check
      _
    $region15: #{tpu_custom_call.1} parent=1 // pred_check_branch
      %100 = sbr.rel (0) target = $region17
    $region16: #{tpu_custom_call.1} parent=1 // pred_region
      %102 = vsyncadd [#allocation7], 0
      %s103 = sshll.u32 [#allocation6], 4
      %s104 = int_to_ptr.vmem [resolvable:$true] %s103
      %s105 = sshll.u32 %s2, 4
      %s106 = int_to_ptr.hbm [resolvable:$true] %s105
      %111 = dma.vmem_to_hbm [thread:$0]  %s104, 256, %s106, [#allocation7], 128, 128, 8
    $region17: #{tpu_custom_call.1} parent=1 // pred_fallthru
      _
    // Predicated region
    $region18: #{tpu_custom_call.1} parent=1 // pred_check
      _
    $region19: #{tpu_custom_call.1} parent=1 // pred_check_branch
      %113 = sbr.rel (0) target = $region21
    $region20: #{tpu_custom_call.1} parent=1 // pred_region
      %115 = vsyncadd [#allocation7], 0
      %s116 = sshll.u32 [#allocation8], 4
      %s117 = int_to_ptr.vmem [resolvable:$true] %s116
      %s118 = sshll.u32 %s3, 4
      %s119 = int_to_ptr.hbm [resolvable:$true] %s118
      %124 = dma.vmem_to_hbm [thread:$0]  %s117, 256, %s119, [#allocation7], 128, 128, 8
    $region21: #{tpu_custom_call.1} parent=1 // pred_fallthru
      _
    // Predicated region
    $region22: #{tpu_custom_call.1} parent=1 // pred_check
      _
    $region23: #{tpu_custom_call.1} parent=1 // pred_check_branch
      %126 = sbr.rel (0) target = $region25
    $region24: #{tpu_custom_call.1} parent=1 // pred_region
      %128 = vsyncadd [#allocation10], 0
      %s129 = sshll.u32 [#allocation9], 4
      %s130 = int_to_ptr.vmem [resolvable:$true] %s129
      %s131 = sshll.u32 %s4, 4
      %s132 = int_to_ptr.hbm [resolvable:$true] %s131
      %137 = dma.vmem_to_hbm [thread:$0]  %s130, 256, %s132, [#allocation10], 128, 128, 8
    $region25: #{tpu_custom_call.1} parent=1 // pred_fallthru
      _
    // Predicated region
    $region26: #{tpu_custom_call.1} parent=1 // pred_check
      _
    $region27: #{tpu_custom_call.1} parent=1 // pred_check_branch
      %139 = sbr.rel (0) target = $region29
    $region28: #{tpu_custom_call.1} parent=1 // pred_region
      %141 = vsyncadd [#allocation10], 0
      %s142 = sshll.u32 [#allocation11], 4
      %s143 = int_to_ptr.vmem [resolvable:$true] %s142
      %s144 = sshll.u32 %s5, 4
      %s145 = int_to_ptr.hbm [resolvable:$true] %s144
      %150 = dma.vmem_to_hbm [thread:$0]  %s143, 64, %s145, [#allocation10], 32, 32, 2
    $region29: #{tpu_custom_call.1} parent=1 // pred_fallthru
      _
    // Predicated region
    $region30: #{tpu_custom_call.1} parent=1 // pred_check
      _
    $region31: #{tpu_custom_call.1} parent=1 // pred_check_branch
      %152 = sbr.rel (0) target = $region33
    $region32: #{tpu_custom_call.1} parent=1 // pred_region
      %154 = vsyncadd [#allocation13], 0
      %s155 = sshll.u32 [#allocation12], 4
      %s156 = int_to_ptr.vmem [resolvable:$true] %s155
      %s157 = sshll.u32 %s6, 4
      %s158 = int_to_ptr.hbm [resolvable:$true] %s157
      %163 = dma.vmem_to_hbm [thread:$0]  %s156, 64, %s158, [#allocation13], 32, 32, 2
    $region33: #{tpu_custom_call.1} parent=1 // pred_fallthru
      _
    // Predicated region
    $region34: #{tpu_custom_call.1} parent=1 // pred_check
      _
    $region35: #{tpu_custom_call.1} parent=1 // pred_check_branch
      %165 = sbr.rel (0) target = $region37
    $region36: #{tpu_custom_call.1} parent=1 // pred_region
      %167 = dma.done [#allocation4], 256
    $region37: #{tpu_custom_call.1} parent=1 // pred_fallthru
      _
    // Predicated region
    $region38: #{tpu_custom_call.1} parent=1 // pred_check
      _
    $region39: #{tpu_custom_call.1} parent=1 // pred_check_branch
      %169 = sbr.rel (0) target = $region41
    $region40: #{tpu_custom_call.1} parent=1 // pred_region
      %171 = dma.done [#allocation7], 256
    $region41: #{tpu_custom_call.1} parent=1 // pred_fallthru
      _
    // Predicated region
    $region42: #{tpu_custom_call.1} parent=1 // pred_check
      _
    $region43: #{tpu_custom_call.1} parent=1 // pred_check_branch
      %173 = sbr.rel (0) target = $region45
    $region44: #{tpu_custom_call.1} parent=1 // pred_region
      %175 = dma.done [#allocation7], 256
    $region45: #{tpu_custom_call.1} parent=1 // pred_fallthru
      _
    // Predicated region
    $region46: #{tpu_custom_call.1} parent=1 // pred_check
      _
    $region47: #{tpu_custom_call.1} parent=1 // pred_check_branch
      %177 = sbr.rel (0) target = $region49
    $region48: #{tpu_custom_call.1} parent=1 // pred_region
      %179 = dma.done [#allocation10], 256
    $region49: #{tpu_custom_call.1} parent=1 // pred_fallthru
      _
    // Predicated region
    $region50: #{tpu_custom_call.1} parent=1 // pred_check
      _
    $region51: #{tpu_custom_call.1} parent=1 // pred_check_branch
      %181 = sbr.rel (0) target = $region53
    $region52: #{tpu_custom_call.1} parent=1 // pred_region
      %183 = dma.done [#allocation10], 64
    $region53: #{tpu_custom_call.1} parent=1 // pred_fallthru
      _
    // Predicated region
    $region54: #{tpu_custom_call.1} parent=1 // pred_check
      _
    $region55: #{tpu_custom_call.1} parent=1 // pred_check_branch
      %185 = sbr.rel (0) target = $region57
    $region56: #{tpu_custom_call.1} parent=1 // pred_region
      %187 = dma.done [#allocation13], 64
    $region57: #{tpu_custom_call.1} parent=1 // pred_fallthru
      _
    %188 = vsyncpa [#allocation3], 1
    %189 = vsyncpa [#allocation4], 1
    %190 = vsyncpa [#allocation7], 1
    %191 = vsyncpa [#allocation10], 1
    %192 = vsyncpa [#allocation13], 1

</llo_original>
